<compile_context>
chip_gen: v7x
topology: tpu7x:2x2x1
jax: 0.10.0
libtpu: 0.0.40
codegen_flags: <defaults>
</compile_context>

<pallas_src>
import math
import numpy as np
import jax
import jax.numpy as jnp
from jax.experimental import pallas as pl
from jax.experimental.pallas import tpu as pltpu


def _round_up(v, m):
    return ((v + m - 1) // m) * m


def _vmem_cap_bytes():
    # Usable VMEM per generation: physical capacity minus 25% headroom for
    # compiler-internal scratch (v7x: 64 MiB -> 48 MiB; v5e/v6e: 128 -> 96).
    cap = None
    try:
        info = pltpu.get_tpu_info()
        cap = getattr(info, "vmem_capacity_bytes", None)
    except Exception:
        cap = None
    if not cap:
        cap = 64 * 1024 * 1024  # conservative default (v7x per-core)
    return int(cap) * 3 // 4


def _maybe_pad(a, pads):
    # Skip jnp.pad entirely when already aligned (no extra HBM copy of adj).
    if any(hi for _, hi in pads):
        return jnp.pad(a, pads)
    return a


def gcn_kernel(x_ref, adj_ref, w_ref, b_ref, o_ref, acc_ref):
    # One (graph b, output-row tile i, reduction tile k) grid step.
    #   x_ref:   (tile_n, INp)    rows of x[b] for reduction tile k
    #   adj_ref: (tile_n, tile_n) adj[b][row tile i, col tile k]
    #   w_ref:   (INp, OUTp)      weight (resident, constant index_map)
    #   b_ref:   (1, OUTp)        bias, f32 (resident)
    #   o_ref:   (tile_n, OUTp)   output rows of tile i for graph b
    #   acc_ref: (tile_n, OUTp)   f32 accumulator scratch
    k = pl.program_id(2)

    @pl.when(k == 0)
    def _init():
        acc_ref[...] = jnp.zeros_like(acc_ref)

    # support rows for this reduction tile: (tile_n, OUTp), f32 accumulation.
    support = jnp.dot(x_ref[...], w_ref[...], preferred_element_type=jnp.float32)
    # Cast back to the MXU input dtype so the dominant matmul also runs at
    # bf16 rate when requested (one extra rounding step, documented).
    support = support.astype(adj_ref.dtype)
    acc_ref[...] += jnp.dot(adj_ref[...], support,
                            preferred_element_type=jnp.float32)

    @pl.when(k == pl.num_programs(2) - 1)
    def _finalize():
        o_ref[...] = (acc_ref[...] + b_ref[...]).astype(o_ref.dtype)


def graph_convolution(x, adj, weight, bias, *,
                      compute_dtype=jnp.float32, out_dtype=jnp.float32):
    """output[b] = adj[b] @ (x[b] @ weight) + bias.

    compute_dtype: MXU input dtype for x/adj/weight.  Use bfloat16 on
    v6e/v7x (adj stream is the HBM-bound resource); accumulation stays f32.
    """
    B, N, IN = x.shape
    OUT = weight.shape[1]
    itemsize = np.dtype(compute_dtype).itemsize
    out_itemsize = np.dtype(out_dtype).itemsize
    sublane = 8 * (4 // itemsize)  # 8 for f32, 16 for bf16

    in_p = _round_up(IN, 128)
    out_p = _round_up(OUT, 128)

    cap = _vmem_cap_bytes()
    budget = cap // 2  # pipelining slack / compiler temporaries

    def footprint(t):
        # Everything resident in VMEM per grid step, double-buffered where
        # the pipeline needs it, plus in-kernel temporaries (review item).
        x_tile = 2 * t * in_p * itemsize
        adj_tile = 2 * t * t * itemsize
        out_tile = 2 * t * out_p * out_itemsize
        w_res = in_p * out_p * itemsize            # single-buffered weight
        b_res = out_p * 4
        acc = t * out_p * 4                        # f32 accumulator scratch
        temps = t * out_p * (4 + itemsize) + t * out_p * 4  # support f32 + cast + dot result
        return x_tile + adj_tile + out_tile + w_res + b_res + acc + temps

    # Tile over N.  Small graphs: one tile covering the sublane-rounded node
    # dim; larger graphs: 512/256/128-wide tiles (multiples of 128 -> the
    # adjacency block stays lane-dense) chosen to minimise padding while
    # fitting the VMEM budget.
    n_sub = _round_up(N, sublane)
    if n_sub <= 512 and footprint(n_sub) <= budget:
        tile_n, n_p = n_sub, n_sub
    else:
        fitting = [t for t in (512, 256, 128) if footprint(t) <= budget]
        if not fitting:
            fitting = [128]  # TODO(synk): tile IN/OUT for extremely wide layers.
        tile_n = min(fitting, key=lambda t: (_round_up(N, t), -t))
        n_p = _round_up(N, tile_n)
    num_nt = n_p // tile_n  # row tiles == reduction tiles

    xc = x.astype(compute_dtype)
    adjc = adj.astype(compute_dtype)
    wc = weight.astype(compute_dtype)

    # Zero padding is numerically inert (padded rows/cols contribute zeros
    # and padded outputs are sliced off below).
    x_pad = _maybe_pad(xc, ((0, 0), (0, n_p - N), (0, in_p - IN)))
    adj_pad = _maybe_pad(adjc, ((0, 0), (0, n_p - N), (0, n_p - N)))
    w_pad = _maybe_pad(wc, ((0, in_p - IN), (0, out_p - OUT)))
    b_pad = _maybe_pad(bias.astype(jnp.float32), ((0, out_p - OUT),)).reshape(1, out_p)

    flops = 2 * B * num_nt * n_p * in_p * out_p + 2 * B * n_p * n_p * out_p
    bytes_accessed = (
        B * num_nt * n_p * in_p * itemsize   # x (re-streamed per row tile)
        + B * n_p * n_p * itemsize           # adj (each tile once)
        + in_p * out_p * itemsize            # weight
        + out_p * 4                          # bias
        + B * n_p * out_p * out_itemsize     # out
    )
    cost = pl.CostEstimate(flops=int(flops), transcendentals=0,
                           bytes_accessed=int(bytes_accessed))

    vmem_limit = int(min(cap, max(2 * footprint(tile_n), 32 * 1024 * 1024)))
    grid = (B, num_nt, num_nt)

    def run(single_buffer_params):
        param_kw = (dict(pipeline_mode=pl.Buffered(1))
                    if single_buffer_params else {})
        grid_spec = pltpu.PrefetchScalarGridSpec(
            num_scalar_prefetch=0,
            grid=grid,
            in_specs=[
                # x rows for reduction tile k of graph b.
                pl.BlockSpec((pl.Squeezed(), tile_n, in_p),
                             lambda b, i, k: (b, k, 0)),
                # adjacency tile (row tile i, col tile k) of graph b.
                pl.BlockSpec((pl.Squeezed(), tile_n, tile_n),
                             lambda b, i, k: (b, i, k)),
                # weight / bias: constant index map -> fetched once.
                pl.BlockSpec((in_p, out_p), lambda b, i, k: (0, 0), **param_kw),
                pl.BlockSpec((1, out_p), lambda b, i, k: (0, 0), **param_kw),
            ],
            out_specs=pl.BlockSpec((pl.Squeezed(), tile_n, out_p),
                                   lambda b, i, k: (b, i, 0)),
            scratch_shapes=[pltpu.VMEM((tile_n, out_p), jnp.float32)],
        )
        return pl.pallas_call(
            gcn_kernel,
            out_shape=jax.ShapeDtypeStruct((B, n_p, out_p), out_dtype),
            grid_spec=grid_spec,
            compiler_params=pltpu.CompilerParams(
                dimension_semantics=("parallel", "parallel", "arbitrary"),
                vmem_limit_bytes=vmem_limit,
            ),
            cost_estimate=cost,
        )(x_pad, adj_pad, w_pad, b_pad)

    try:
        out_pad = run(True)
    except Exception:
        # Fallback if this jax build rejects Buffered(1) on a top-level
        # BlockSpec: default double-buffering (VMEM footprint only, not
        # correctness).
        out_pad = run(False)

    return out_pad[:, :N, :OUT]


if __name__ == "__main__":
    # Small shapes consistent with the layer: batch of graphs, nodes, features.
    B, N = 2, 16
    IN_F, OUT_F = 32, 32

    key = jax.random.PRNGKey(0)
    k_x, k_adj, k_w, k_b = jax.random.split(key, 4)

    # Deterministic parameter init mirroring reset_parameters():
    # uniform(-stdv, stdv) with stdv = 1/sqrt(out_features).
    stdv = 1.0 / math.sqrt(OUT_F)
    weight = jax.random.uniform(k_w, (IN_F, OUT_F), jnp.float32, -stdv, stdv)
    bias = jax.random.uniform(k_b, (OUT_F,), jnp.float32, -stdv, stdv)

    # Example inputs: node features + dense row-normalized adjacency.
    x = jax.random.normal(k_x, (B, N, IN_F), jnp.float32)
    adj_raw = jax.random.uniform(k_adj, (B, N, N), jnp.float32)
    adj = adj_raw / jnp.sum(adj_raw, axis=-1, keepdims=True)

    # Reference in plain JAX (same semantics as the PyTorch forward).
    ref = jnp.einsum("bnm,bmf->bnf", adj,
                     jnp.einsum("bni,io->bno", x, weight)) + bias

    # f32 path: exact match.
    out_f32 = jax.block_until_ready(graph_convolution(x, adj, weight, bias))
    assert out_f32.shape == (B, N, OUT_F)
    assert jnp.allclose(out_f32, ref, atol=1e-5, rtol=1e-5)

    # bf16 MXU-input path (f32 accumulation): looser tolerance.
    out_bf16 = jax.block_until_ready(
        graph_convolution(x, adj, weight, bias, compute_dtype=jnp.bfloat16)
    )
    assert out_bf16.shape == (B, N, OUT_F)
    assert jnp.allclose(out_bf16, ref, atol=5e-2, rtol=5e-2)

    print("KERNEL_OK")
</pallas_src>

<mosaic_0001>
module attributes {stable_mosaic.version = 11 : i64} {
  func.func @gcn_kernel(%arg0: i32, %arg1: i32, %arg2: i32, %arg3: memref<1x16x128xf32, #tpu.memory_space<vmem>>, %arg4: memref<1x16x16xf32, #tpu.memory_space<vmem>>, %arg5: memref<128x128xf32, #tpu.memory_space<vmem>>, %arg6: memref<1x128xf32, #tpu.memory_space<vmem>>, %arg7: memref<1x16x128xf32, #tpu.memory_space<vmem>>, %arg8: memref<16x128xf32, #tpu.memory_space<vmem>>) attributes {dimension_semantics = [#tpu.dimension_semantics<parallel>, #tpu.dimension_semantics<parallel>, #tpu.dimension_semantics<arbitrary>], iteration_bounds = array<i64: 2, 1, 1>, scalar_prefetch = 0 : i64, scratch_operands = 1 : i64, tpu.core_type = #tpu.core_type<tc>, window_params = [{transform_indices = @transform_0, window_bounds = array<i64: 1, 16, 128>}, {transform_indices = @transform_1, window_bounds = array<i64: 1, 16, 16>}, {pipeline_mode = #tpu.pipeline_mode<synchronous>, transform_indices = @transform_2, window_bounds = array<i64: 128, 128>}, {pipeline_mode = #tpu.pipeline_mode<synchronous>, transform_indices = @transform_3, window_bounds = array<i64: 1, 128>}, {transform_indices = @transform_4, window_bounds = array<i64: 1, 16, 128>}]} {
    %c0_i32 = arith.constant 0 : i32
    %0 = arith.cmpi eq, %arg2, %c0_i32 : i32
    %1 = arith.extui %0 : i1 to i32
    %c0_i32_0 = arith.constant 0 : i32
    %2 = arith.cmpi ne, %1, %c0_i32_0 : i32
    scf.if %2 {
      %cst_15 = arith.constant 0.000000e+00 : f32
      %16 = vector.broadcast %cst_15 : f32 to vector<16x128xf32>
      %c0_16 = arith.constant 0 : index
      %c0_17 = arith.constant 0 : index
      %17 = vector.load %arg8[%c0_16, %c0_17] : memref<16x128xf32, #tpu.memory_space<vmem>>, vector<16x128xf32>
      tpu.vector_store %arg8[%c0_16, %c0_17], %16 {strides = array<i32>} : memref<16x128xf32, #tpu.memory_space<vmem>>, vector<16x128xf32>,
    } else {
    }
    %c0 = arith.constant 0 : index
    %c0_1 = arith.constant 0 : index
    %c0_2 = arith.constant 0 : index
    %3 = vector.load %arg3[%c0, %c0_1, %c0_2] : memref<1x16x128xf32, #tpu.memory_space<vmem>>, vector<1x16x128xf32>
    %4 = vector.shape_cast %3 : vector<1x16x128xf32> to vector<16x128xf32>
    %c0_3 = arith.constant 0 : index
    %c0_4 = arith.constant 0 : index
    %5 = vector.load %arg5[%c0_3, %c0_4] : memref<128x128xf32, #tpu.memory_space<vmem>>, vector<128x128xf32>
    %cst = arith.constant dense<0.000000e+00> : vector<16x128xf32>
    %6 = tpu.matmul %4, %5, %cst {dimension_numbers = #tpu.dot_dimension_numbers<[1], [0], [0], [1], [0, 0, 1, 1], [], []>} : vector<16x128xf32>, vector<128x128xf32>, vector<16x128xf32> -> vector<16x128xf32>
    %c0_5 = arith.constant 0 : index
    %c0_6 = arith.constant 0 : index
    %7 = vector.load %arg8[%c0_5, %c0_6] : memref<16x128xf32, #tpu.memory_space<vmem>>, vector<16x128xf32>
    %c0_7 = arith.constant 0 : index
    %c0_8 = arith.constant 0 : index
    %c0_9 = arith.constant 0 : index
    %8 = vector.load %arg4[%c0_7, %c0_8, %c0_9] : memref<1x16x16xf32, #tpu.memory_space<vmem>>, vector<1x16x16xf32>
    %9 = vector.shape_cast %8 : vector<1x16x16xf32> to vector<16x16xf32>
    %cst_10 = arith.constant dense<0.000000e+00> : vector<16x128xf32>
    %10 = tpu.matmul %9, %6, %cst_10 {dimension_numbers = #tpu.dot_dimension_numbers<[1], [0], [0], [1], [0, 0, 1, 1], [], []>} : vector<16x16xf32>, vector<16x128xf32>, vector<16x128xf32> -> vector<16x128xf32>
    %11 = arith.addf %7, %10 : vector<16x128xf32>
    %c0_11 = arith.constant 0 : index
    %c0_12 = arith.constant 0 : index
    %12 = vector.load %arg8[%c0_11, %c0_12] : memref<16x128xf32, #tpu.memory_space<vmem>>, vector<16x128xf32>
    tpu.vector_store %arg8[%c0_11, %c0_12], %11 {strides = array<i32>} : memref<16x128xf32, #tpu.memory_space<vmem>>, vector<16x128xf32>,
    %c0_i32_13 = arith.constant 0 : i32
    %13 = arith.cmpi eq, %arg2, %c0_i32_13 : i32
    %14 = arith.extui %13 : i1 to i32
    %c0_i32_14 = arith.constant 0 : i32
    %15 = arith.cmpi ne, %14, %c0_i32_14 : i32
    scf.if %15 {
      %c0_15 = arith.constant 0 : index
      %c0_16 = arith.constant 0 : index
      %16 = vector.load %arg8[%c0_15, %c0_16] : memref<16x128xf32, #tpu.memory_space<vmem>>, vector<16x128xf32>
      %c0_17 = arith.constant 0 : index
      %c0_18 = arith.constant 0 : index
      %17 = vector.load %arg6[%c0_17, %c0_18] : memref<1x128xf32, #tpu.memory_space<vmem>>, vector<1x128xf32>
      %18 = vector.broadcast %17 : vector<1x128xf32> to vector<16x128xf32>
      %19 = arith.addf %16, %18 : vector<16x128xf32>
      %c0_19 = arith.constant 0 : index
      %c0_20 = arith.constant 0 : index
      %c0_21 = arith.constant 0 : index
      %20 = vector.load %arg7[%c0_19, %c0_20, %c0_21] : memref<1x16x128xf32, #tpu.memory_space<vmem>>, vector<1x16x128xf32>
      %21 = vector.shape_cast %20 : vector<1x16x128xf32> to vector<16x128xf32>
      %22 = vector.shape_cast %19 : vector<16x128xf32> to vector<1x16x128xf32>
      tpu.vector_store %arg7[%c0_19, %c0_20, %c0_21], %22 {strides = array<i32>} : memref<1x16x128xf32, #tpu.memory_space<vmem>>, vector<1x16x128xf32>,
    } else {
    }
    return
  }
  func.func @transform_0(%arg0: i32, %arg1: i32, %arg2: i32) -> (i32, i32, i32) {
    %c0_i32 = arith.constant 0 : i32
    %c0_i32_0 = arith.constant 0 : i32
    return %arg0, %arg2, %c0_i32 : i32, i32, i32
  }
  func.func @transform_1(%arg0: i32, %arg1: i32, %arg2: i32) -> (i32, i32, i32) {
    %c0_i32 = arith.constant 0 : i32
    return %arg0, %arg1, %arg2 : i32, i32, i32
  }
  func.func @transform_2(%arg0: i32, %arg1: i32, %arg2: i32) -> (i32, i32) {
    %c0_i32 = arith.constant 0 : i32
    %c0_i32_0 = arith.constant 0 : i32
    %c0_i32_1 = arith.constant 0 : i32
    return %c0_i32, %c0_i32_0 : i32, i32
  }
  func.func @transform_3(%arg0: i32, %arg1: i32, %arg2: i32) -> (i32, i32) {
    %c0_i32 = arith.constant 0 : i32
    %c0_i32_0 = arith.constant 0 : i32
    %c0_i32_1 = arith.constant 0 : i32
    return %c0_i32, %c0_i32_0 : i32, i32
  }
  func.func @transform_4(%arg0: i32, %arg1: i32, %arg2: i32) -> (i32, i32, i32) {
    %c0_i32 = arith.constant 0 : i32
    %c0_i32_0 = arith.constant 0 : i32
    return %arg0, %arg1, %c0_i32 : i32, i32, i32
  }
}

module attributes {stable_mosaic.version = 11 : i64} {
  func.func @gcn_kernel(%arg0: i32, %arg1: i32, %arg2: i32, %arg3: memref<1x16x128xf32, #tpu.memory_space<vmem>>, %arg4: memref<1x16x16xf32, #tpu.memory_space<vmem>>, %arg5: memref<128x128xf32, #tpu.memory_space<vmem>>, %arg6: memref<1x128xf32, #tpu.memory_space<vmem>>, %arg7: memref<1x16x128xf32, #tpu.memory_space<vmem>>, %arg8: memref<16x128xf32, #tpu.memory_space<vmem>>) attributes {dimension_semantics = [#tpu.dimension_semantics<parallel>, #tpu.dimension_semantics<parallel>, #tpu.dimension_semantics<arbitrary>], iteration_bounds = array<i64: 2, 1, 1>, scalar_prefetch = 0 : i64, scratch_operands = 1 : i64, tpu.core_type = #tpu.core_type<tc>, window_params = [{transform_indices = @transform_0, window_bounds = array<i64: 1, 16, 128>}, {transform_indices = @transform_1, window_bounds = array<i64: 1, 16, 16>}, {pipeline_mode = #tpu.pipeline_mode<synchronous>, transform_indices = @transform_2, window_bounds = array<i64: 128, 128>}, {pipeline_mode = #tpu.pipeline_mode<synchronous>, transform_indices = @transform_3, window_bounds = array<i64: 1, 128>}, {transform_indices = @transform_4, window_bounds = array<i64: 1, 16, 128>}]} {
    %c0_i32 = arith.constant 0 : i32
    %0 = arith.cmpi eq, %arg2, %c0_i32 : i32
    %1 = arith.extui %0 : i1 to i32
    %c0_i32_0 = arith.constant 0 : i32
    %2 = arith.cmpi ne, %1, %c0_i32_0 : i32
    scf.if %2 {
      %cst_15 = arith.constant 0.000000e+00 : f32
      %16 = vector.broadcast %cst_15 : f32 to vector<16x128xf32>
      %c0_16 = arith.constant 0 : index
      %c0_17 = arith.constant 0 : index
      %17 = vector.load %arg8[%c0_16, %c0_17] : memref<16x128xf32, #tpu.memory_space<vmem>>, vector<16x128xf32>
      tpu.vector_store %arg8[%c0_16, %c0_17], %16 {strides = array<i32>} : memref<16x128xf32, #tpu.memory_space<vmem>>, vector<16x128xf32>,
    } else {
    }
    %c0 = arith.constant 0 : index
    %c0_1 = arith.constant 0 : index
    %c0_2 = arith.constant 0 : index
    %3 = vector.load %arg3[%c0, %c0_1, %c0_2] : memref<1x16x128xf32, #tpu.memory_space<vmem>>, vector<1x16x128xf32>
    %4 = vector.shape_cast %3 : vector<1x16x128xf32> to vector<16x128xf32>
    %c0_3 = arith.constant 0 : index
    %c0_4 = arith.constant 0 : index
    %5 = vector.load %arg5[%c0_3, %c0_4] : memref<128x128xf32, #tpu.memory_space<vmem>>, vector<128x128xf32>
    %cst = arith.constant dense<0.000000e+00> : vector<16x128xf32>
    %6 = tpu.matmul %4, %5, %cst {dimension_numbers = #tpu.dot_dimension_numbers<[1], [0], [0], [1], [0, 0, 1, 1], [], []>} : vector<16x128xf32>, vector<128x128xf32>, vector<16x128xf32> -> vector<16x128xf32>
    %c0_5 = arith.constant 0 : index
    %c0_6 = arith.constant 0 : index
    %7 = vector.load %arg8[%c0_5, %c0_6] : memref<16x128xf32, #tpu.memory_space<vmem>>, vector<16x128xf32>
    %c0_7 = arith.constant 0 : index
    %c0_8 = arith.constant 0 : index
    %c0_9 = arith.constant 0 : index
    %8 = vector.load %arg4[%c0_7, %c0_8, %c0_9] : memref<1x16x16xf32, #tpu.memory_space<vmem>>, vector<1x16x16xf32>
    %9 = vector.shape_cast %8 : vector<1x16x16xf32> to vector<16x16xf32>
    %cst_10 = arith.constant dense<0.000000e+00> : vector<16x128xf32>
    %10 = tpu.matmul %9, %6, %cst_10 {dimension_numbers = #tpu.dot_dimension_numbers<[1], [0], [0], [1], [0, 0, 1, 1], [], []>} : vector<16x16xf32>, vector<16x128xf32>, vector<16x128xf32> -> vector<16x128xf32>
    %11 = arith.addf %7, %10 : vector<16x128xf32>
    %c0_11 = arith.constant 0 : index
    %c0_12 = arith.constant 0 : index
    %12 = vector.load %arg8[%c0_11, %c0_12] : memref<16x128xf32, #tpu.memory_space<vmem>>, vector<16x128xf32>
    tpu.vector_store %arg8[%c0_11, %c0_12], %11 {strides = array<i32>} : memref<16x128xf32, #tpu.memory_space<vmem>>, vector<16x128xf32>,
    %c0_i32_13 = arith.constant 0 : i32
    %13 = arith.cmpi eq, %arg2, %c0_i32_13 : i32
    %14 = arith.extui %13 : i1 to i32
    %c0_i32_14 = arith.constant 0 : i32
    %15 = arith.cmpi ne, %14, %c0_i32_14 : i32
    scf.if %15 {
      %c0_15 = arith.constant 0 : index
      %c0_16 = arith.constant 0 : index
      %16 = vector.load %arg8[%c0_15, %c0_16] : memref<16x128xf32, #tpu.memory_space<vmem>>, vector<16x128xf32>
      %c0_17 = arith.constant 0 : index
      %c0_18 = arith.constant 0 : index
      %17 = vector.load %arg6[%c0_17, %c0_18] : memref<1x128xf32, #tpu.memory_space<vmem>>, vector<1x128xf32>
      %18 = vector.broadcast %17 : vector<1x128xf32> to vector<16x128xf32>
      %19 = arith.addf %16, %18 : vector<16x128xf32>
      %c0_19 = arith.constant 0 : index
      %c0_20 = arith.constant 0 : index
      %c0_21 = arith.constant 0 : index
      %20 = vector.load %arg7[%c0_19, %c0_20, %c0_21] : memref<1x16x128xf32, #tpu.memory_space<vmem>>, vector<1x16x128xf32>
      %21 = vector.shape_cast %20 : vector<1x16x128xf32> to vector<16x128xf32>
      %22 = vector.shape_cast %19 : vector<16x128xf32> to vector<1x16x128xf32>
      tpu.vector_store %arg7[%c0_19, %c0_20, %c0_21], %22 {strides = array<i32>} : memref<1x16x128xf32, #tpu.memory_space<vmem>>, vector<1x16x128xf32>,
    } else {
    }
    return
  }
  func.func @transform_0(%arg0: i32, %arg1: i32, %arg2: i32) -> (i32, i32, i32) {
    %c0_i32 = arith.constant 0 : i32
    %c0_i32_0 = arith.constant 0 : i32
    return %arg0, %arg2, %c0_i32 : i32, i32, i32
  }
  func.func @transform_1(%arg0: i32, %arg1: i32, %arg2: i32) -> (i32, i32, i32) {
    %c0_i32 = arith.constant 0 : i32
    return %arg0, %arg1, %arg2 : i32, i32, i32
  }
  func.func @transform_2(%arg0: i32, %arg1: i32, %arg2: i32) -> (i32, i32) {
    %c0_i32 = arith.constant 0 : i32
    %c0_i32_0 = arith.constant 0 : i32
    %c0_i32_1 = arith.constant 0 : i32
    return %c0_i32, %c0_i32_0 : i32, i32
  }
  func.func @transform_3(%arg0: i32, %arg1: i32, %arg2: i32) -> (i32, i32) {
    %c0_i32 = arith.constant 0 : i32
    %c0_i32_0 = arith.constant 0 : i32
    %c0_i32_1 = arith.constant 0 : i32
    return %c0_i32, %c0_i32_0 : i32, i32
  }
  func.func @transform_4(%arg0: i32, %arg1: i32, %arg2: i32) -> (i32, i32, i32) {
    %c0_i32 = arith.constant 0 : i32
    %c0_i32_0 = arith.constant 0 : i32
    return %arg0, %arg1, %c0_i32 : i32, i32, i32
  }
}

</mosaic_0001>

<llo_original>
// kernel: tpu_custom_call.1
$region0: #{tpu_custom_call.1}
  #allocation0 [shape = 'u32[]', space=smem, size = 0x4, offset = 0x4, fixed_abs, tag = 'smem constant byte address 0x4 - core index']
  #allocation1 [shape = 'u32[144,128]{1,0:T(1,128)}', space=vmem, size = 0x12000, scoped, tag = 'internal scratch']
  #allocation2 [shape = 'f32[16,128]{1,0:T(8,128)}', space=vmem, size = 0x2000, scoped, tag = 'scratch operand']
  %s0 = inlined_call_operand.hbm [shape: f32[2,16,128], index: 0, kind: input, shape index: {}]
  %s1 = inlined_call_operand.hbm [shape: f32[2,16,16], index: 1, kind: input, shape index: {}]
  %s2 = inlined_call_operand.hbm [shape: f32[128,128], index: 2, kind: input, shape index: {}]
  %s3 = inlined_call_operand.vmem [shape: f32[1,128], index: 3, kind: input, shape index: {}]
  %s4 = inlined_call_operand.hbm [shape: f32[2,16,128], index: 4, kind: output, shape index: {}]
  %s5 = sld [smem:[#allocation0]]
  $region69: #{tpu_custom_call.1} parent=0
    _
  %s7 = ssub.s32 1, %s5
  %s8 = scalar_select 0, %s7, %s5
  $region1: #{tpu_custom_call.1} parent=0
    #allocation3 [shape = 'u8[16384]{0}', space=vmem, size = 0x4000, scoped, tag = 'input window, operand 0']
    #allocation4 [shape = 's32[2]{0}', space=sflag, size = 0x8, scoped, tag = 'scoped memory for tpu_custom_call.1']
    #allocation5 [shape = 's32[2]{0}', space=sflag, size = 0x8, scoped, tag = 'scoped memory for tpu_custom_call.1']
    #allocation6 [shape = 'u8[16384]{0}', space=vmem, size = 0x4000, scoped, tag = 'input window, operand 1']
    #allocation7 [shape = 's32[2]{0}', space=sflag, size = 0x8, scoped, tag = 'scoped memory for tpu_custom_call.1']
    #allocation8 [shape = 'u8[65536]{0}', space=vmem, size = 0x10000, scoped, tag = 'input window, operand 2, single buffered']
    #allocation9 [shape = 'u8[16384]{0}', space=vmem, size = 0x4000, scoped, tag = 'output window, operand 0']
    %9 = vsyncpa [#allocation4], 0
    %s10 = scalar_lea.sflag [#allocation4], 1
    %11 = vsyncpa %s10, 0
    %12 = vsyncpa [#allocation7], 0
    %s13 = scalar_lea.sflag [#allocation7], 1
    %14 = vsyncpa %s13, 0
    %15 = vsyncpa [#allocation5], 0
    %s16 = scalar_lea.sflag [#allocation5], 1
    %17 = vsyncpa %s16, 0
    loop: start=0, step=1, limit=4
    $region2: #{tpu_custom_call.1} parent=1 // loop_pre_header
      _
    $region3: #{tpu_custom_call.1} parent=1 // loop_header
      %s19 = sphi 0, %s23
      %p20 = scmp.ge.s32.totalorder %s19, 4
      %s26 = sphi 0, %s45
      %s27 = sphi 0, %s41
      %s28 = sphi 0, %s37
      %s29 = sphi 0, %s26
      %s30 = sphi 0, %s27
      %s31 = sphi 0, %s28
      %s32 = sphi 0, %s29
      %s33 = sphi 0, %s30
      %s34 = sphi 0, %s31
      %s50 = sphi 0, %s52
      %s53 = sphi 0, %s50
      %s54 = sphi 0, %s53
      %s70 = sphi 0, %s54
      %s80 = sphi 0, %s82
      %s83 = sphi 0, %s80
      %s84 = sphi 0, %s83
      %s100 = sphi 0, %s84
      %s104 = sphi 0, %s104
      %s106 = sphi 0, %s104
      %s107 = sphi 0, %s106
      %s121 = sphi 0, %s107
      %s125 = sphi 0, %s125
      %s127 = sphi 0, %s125
      %s128 = sphi 0, %s127
      %s142 = sphi 0, %s128
      %s150 = sphi 0, %s152
      %s153 = sphi 0, %s150
      %s154 = sphi 0, %s153
      %s170 = sphi 0, %s154
    $region4: #{tpu_custom_call.1} parent=1 // loop_header_branch
      %22 = sbr.rel (%p20) target = $region8
    $region5: #{tpu_custom_call.1} parent=1 // loop_body
      %s24 = ssub.s32 %s19, 1
      %s25 = ssub.s32 %s19, 2
      %s35 = sadd.s32 1, %s28
      %p36 = scmp.ge.s32.totalorder %s35, 1
      %s37 = scalar_select %p36, 0, %s35
      %s38 = sadd.s32 1, %s27
      %s39 = scalar_select %p36, %s38, %s27
      %p40 = scmp.ge.s32.totalorder %s39, 1
      %s41 = scalar_select %p40, 0, %s39
      %s42 = sadd.s32 1, %s26
      %s43 = scalar_select %p40, %s42, %s26
      %p44 = scmp.ge.s32.totalorder %s43, 2
      %s45 = scalar_select %p44, 0, %s43
      %s46 = ssub.s32 %s26, %s45
      %s47 = ssub.s32 %s28, %s37
      %s48 = sor.u32 %s46, %s47
      %p49 = scmp.eq.s32.totalorder %s48, 0
      %s51 = sadd.s32 %s50, 1
      %s52 = scalar_select %p49, %s50, %s51
      %p55 = pneg %p49
      %p56 = scmp.eq.s32.totalorder %s19, 1
      %p57 = por %p55, %p56
      %p58 = scmp.ne.s32.totalorder %s50, %s53
      %p59 = scmp.eq.s32.totalorder %s19, 0
      %p60 = por %p58, %p59
      %p61 = scmp.ne.s32.totalorder %s50, %s53
      %p62 = scmp.eq.s32.totalorder %s24, 1
      %p63 = por %p61, %p62
      %p64 = scmp.ne.s32.totalorder %s53, %s54
      %p65 = scmp.eq.s32.totalorder %s24, 0
      %p66 = por %p64, %p65
      %p67 = scmp.ne.s32.totalorder %s53, %s54
      %p68 = scmp.eq.s32.totalorder %s25, 1
      %p69 = por %p67, %p68
      %p71 = scmp.ne.s32.totalorder %s54, %s70
      %p72 = scmp.eq.s32.totalorder %s25, 0
      %p73 = por %p71, %p72
      %s74 = ssub.s32 %s26, %s45
      %s75 = ssub.s32 %s27, %s41
      %s76 = sor.u32 %s74, %s75
      %s77 = ssub.s32 %s28, %s37
      %s78 = sor.u32 %s76, %s77
      %p79 = scmp.eq.s32.totalorder %s78, 0
      %s81 = sadd.s32 %s80, 1
      %s82 = scalar_select %p79, %s80, %s81
      %p85 = pneg %p79
      %p86 = scmp.eq.s32.totalorder %s19, 1
      %p87 = por %p85, %p86
      %p88 = scmp.ne.s32.totalorder %s80, %s83
      %p89 = scmp.eq.s32.totalorder %s19, 0
      %p90 = por %p88, %p89
      %p91 = scmp.ne.s32.totalorder %s80, %s83
      %p92 = scmp.eq.s32.totalorder %s24, 1
      %p93 = por %p91, %p92
      %p94 = scmp.ne.s32.totalorder %s83, %s84
      %p95 = scmp.eq.s32.totalorder %s24, 0
      %p96 = por %p94, %p95
      %p97 = scmp.ne.s32.totalorder %s83, %s84
      %p98 = scmp.eq.s32.totalorder %s25, 1
      %p99 = por %p97, %p98
      %p101 = scmp.ne.s32.totalorder %s84, %s100
      %p102 = scmp.eq.s32.totalorder %s25, 0
      %p103 = por %p101, %p102
      %s105 = sadd.s32 %s104, 1
      %p108 = scmp.eq.s32.totalorder %s19, 1
      %p109 = scmp.ne.s32.totalorder %s104, %s106
      %p110 = scmp.eq.s32.totalorder %s19, 0
      %p111 = por %p109, %p110
      %p112 = scmp.ne.s32.totalorder %s104, %s106
      %p113 = scmp.eq.s32.totalorder %s24, 1
      %p114 = por %p112, %p113
      %p115 = scmp.ne.s32.totalorder %s106, %s107
      %p116 = scmp.eq.s32.totalorder %s24, 0
      %p117 = por %p115, %p116
      %p118 = scmp.ne.s32.totalorder %s106, %s107
      %p119 = scmp.eq.s32.totalorder %s25, 1
      %p120 = por %p118, %p119
      %p122 = scmp.ne.s32.totalorder %s107, %s121
      %p123 = scmp.eq.s32.totalorder %s25, 0
      %p124 = por %p122, %p123
      %s126 = sadd.s32 %s125, 1
      %p129 = scmp.eq.s32.totalorder %s19, 1
      %p130 = scmp.ne.s32.totalorder %s125, %s127
      %p131 = scmp.eq.s32.totalorder %s19, 0
      %p132 = por %p130, %p131
      %p133 = scmp.ne.s32.totalorder %s125, %s127
      %p134 = scmp.eq.s32.totalorder %s24, 1
      %p135 = por %p133, %p134
      %p136 = scmp.ne.s32.totalorder %s127, %s128
      %p137 = scmp.eq.s32.totalorder %s24, 0
      %p138 = por %p136, %p137
      %p139 = scmp.ne.s32.totalorder %s127, %s128
      %p140 = scmp.eq.s32.totalorder %s25, 1
      %p141 = por %p139, %p140
      %p143 = scmp.ne.s32.totalorder %s128, %s142
      %p144 = scmp.eq.s32.totalorder %s25, 0
      %p145 = por %p143, %p144
      %s146 = ssub.s32 %s26, %s45
      %s147 = ssub.s32 %s27, %s41
      %s148 = sor.u32 %s146, %s147
      %p149 = scmp.eq.s32.totalorder %s148, 0
      %s151 = sadd.s32 %s150, 1
      %s152 = scalar_select %p149, %s150, %s151
      %p155 = pneg %p149
      %p156 = scmp.eq.s32.totalorder %s19, 1
      %p157 = por %p155, %p156
      %p158 = scmp.ne.s32.totalorder %s150, %s153
      %p159 = scmp.eq.s32.totalorder %s19, 0
      %p160 = por %p158, %p159
      %p161 = scmp.ne.s32.totalorder %s150, %s153
      %p162 = scmp.eq.s32.totalorder %s24, 1
      %p163 = por %p161, %p162
      %p164 = scmp.ne.s32.totalorder %s153, %s154
      %p165 = scmp.eq.s32.totalorder %s24, 0
      %p166 = por %p164, %p165
      %p167 = scmp.ne.s32.totalorder %s153, %s154
      %p168 = scmp.eq.s32.totalorder %s25, 1
      %p169 = por %p167, %p168
      %p171 = scmp.ne.s32.totalorder %s154, %s170
      %p172 = scmp.eq.s32.totalorder %s25, 0
      %p173 = por %p171, %p172
      %p174 = scmp.le.s32.totalorder 1, %s19
      %p175 = scmp.lt.s32.totalorder %s19, 3
      %p176 = pnand %p174, %p175
      %p177 = pneg %p176
      // Predicated region
      $region9: #{tpu_custom_call.1} parent=5 // pred_check
        _
      $region10: #{tpu_custom_call.1} parent=5 // pred_check_branch
        %179 = sbr.rel (%p176) target = $region12
      $region11: #{tpu_custom_call.1} parent=5 // pred_region
        %s180 = ssub.s32 %s19, 1
        // Predicated region
        $region13: #{tpu_custom_call.1} parent=11 // pred_check
          %p181 = pneg %p117
        $region14: #{tpu_custom_call.1} parent=11 // pred_check_branch
          %183 = sbr.rel (%p181) target = $region16
        $region15: #{tpu_custom_call.1} parent=11 // pred_region
          %s185 = ssub.s32 2048, 2048
          %186 = vsyncadd [#allocation7], %s185
          %s187 = sshll.u32 [#allocation8], 4
          %s188 = int_to_ptr.vmem [resolvable:$true] %s187
          %193 = dma.hbm_to_vmem [thread:$0]  %s2, 2048, %s188, [#allocation7], 128, 128, 8
        $region16: #{tpu_custom_call.1} parent=11 // pred_fallthru
          _
        // Predicated region
        $region17: #{tpu_custom_call.1} parent=11 // pred_check
          %p194 = pneg %p138
        $region18: #{tpu_custom_call.1} parent=11 // pred_check_branch
          %196 = sbr.rel (%p194) target = $region20
        $region19: #{tpu_custom_call.1} parent=11 // pred_region
          _
        $region20: #{tpu_custom_call.1} parent=11 // pred_fallthru
          _
      $region12: #{tpu_custom_call.1} parent=5 // pred_fallthru
        _
      %p197 = scmp.lt.s32.totalorder %s19, 2
      // Predicated region
      $region21: #{tpu_custom_call.1} parent=5 // pred_check
        %p198 = pneg %p197
      $region22: #{tpu_custom_call.1} parent=5 // pred_check_branch
        %200 = sbr.rel (%p198) target = $region24
      $region23: #{tpu_custom_call.1} parent=5 // pred_region
        // Predicated region
        $region25: #{tpu_custom_call.1} parent=23 // pred_check
          %p201 = pneg %p60
        $region26: #{tpu_custom_call.1} parent=23 // pred_check_branch
          %203 = sbr.rel (%p201) target = $region28
        $region27: #{tpu_custom_call.1} parent=23 // pred_region
          %s204 = sand.u32 %s50, 1
          %s205 = scalar_lea.sflag [#allocation4], %s204
          %s206 = sand.u32 %s50, 1
          %s207 = smul.addr %s206, 16
          %s208 = scalar_lea.vmem [#allocation3], %s207
          %s209 = smul.u32 2, %s28
          %s211 = ssub.s32 256, 256
          %212 = vsyncadd %s205, %s211
          %s213 = smul.addr %s26, 2
          %s214 = sadd.s32 %s209, %s213
          %s215 = smul.addr %s214, 128
          %s216 = scalar_lea.hbm %s0, %s215
          %s217 = sshll.u32 %s208, 4
          %s218 = int_to_ptr.vmem [resolvable:$true] %s217
          %223 = dma.hbm_to_vmem [thread:$0]  %s216, 256, %s218, %s205, 128, 128, 8
        $region28: #{tpu_custom_call.1} parent=23 // pred_fallthru
          _
        // Predicated region
        $region29: #{tpu_custom_call.1} parent=23 // pred_check
          %p224 = pneg %p90
        $region30: #{tpu_custom_call.1} parent=23 // pred_check_branch
          %226 = sbr.rel (%p224) target = $region32
        $region31: #{tpu_custom_call.1} parent=23 // pred_region
          %s227 = sand.u32 %s19, 1
          %s228 = scalar_lea.sflag [#allocation7], %s227
          %s229 = sand.u32 %s80, 1
          %s230 = smul.addr %s229, 16
          %s231 = scalar_lea.vmem [#allocation6], %s230
          %s232 = smul.u32 2, %s27
          %s234 = ssub.s32 256, 256
          %235 = vsyncadd %s228, %s234
          %s236 = sadd.s32 %s28, %s232
          %s237 = smul.addr %s26, 2
          %s238 = sadd.s32 %s236, %s237
          %s239 = smul.addr %s238, 128
          %s240 = scalar_lea.hbm %s1, %s239
          %s241 = sshll.u32 %s231, 4
          %s242 = int_to_ptr.vmem [resolvable:$true] %s241
          %247 = dma.hbm_to_vmem [thread:$0]  %s240, 256, %s242, %s228, 128, 128, 8
        $region32: #{tpu_custom_call.1} parent=23 // pred_fallthru
          _
      $region24: #{tpu_custom_call.1} parent=5 // pred_fallthru
        _
      %p248 = scmp.le.s32.totalorder 1, %s19
      %p249 = scmp.lt.s32.totalorder %s19, 3
      %p250 = pnand %p248, %p249
      %p251 = pneg %p250
      // Predicated region
      $region33: #{tpu_custom_call.1} parent=5 // pred_check
        _
      $region34: #{tpu_custom_call.1} parent=5 // pred_check_branch
        %253 = sbr.rel (%p250) target = $region36
      $region35: #{tpu_custom_call.1} parent=5 // pred_region
        %s254 = ssub.s32 %s19, 1
        %s255 = sand.u32 %s53, 1
        %s256 = scalar_lea.sflag [#allocation4], %s255
        %s257 = sand.u32 %s53, 1
        %s258 = smul.addr %s257, 16
        %s259 = scalar_lea.vmem [#allocation3], %s258
        // Predicated region
        $region37: #{tpu_custom_call.1} parent=35 // pred_check
          %p260 = pneg %p66
        $region38: #{tpu_custom_call.1} parent=35 // pred_check_branch
          %262 = sbr.rel (%p260) target = $region40
        $region39: #{tpu_custom_call.1} parent=35 // pred_region
          %263 = dma.done %s256, 256
        $region40: #{tpu_custom_call.1} parent=35 // pred_fallthru
          _
        %s264 = sand.u32 %s24, 1
        %s265 = scalar_lea.sflag [#allocation7], %s264
        %s266 = sand.u32 %s83, 1
        %s267 = smul.addr %s266, 16
        %s268 = scalar_lea.vmem [#allocation6], %s267
        // Predicated region
        $region41: #{tpu_custom_call.1} parent=35 // pred_check
          %p269 = pneg %p96
        $region42: #{tpu_custom_call.1} parent=35 // pred_check_branch
          %271 = sbr.rel (%p269) target = $region44
        $region43: #{tpu_custom_call.1} parent=35 // pred_region
          %272 = dma.done %s265, 256
        $region44: #{tpu_custom_call.1} parent=35 // pred_fallthru
          _
        // Predicated region
        $region45: #{tpu_custom_call.1} parent=35 // pred_check
          %p273 = pneg %p117
        $region46: #{tpu_custom_call.1} parent=35 // pred_check_branch
          %275 = sbr.rel (%p273) target = $region48
        $region47: #{tpu_custom_call.1} parent=35 // pred_region
          %276 = dma.done [#allocation7], 2048
        $region48: #{tpu_custom_call.1} parent=35 // pred_fallthru
          _
        %s277 = sand.u32 %s53, 1
        %s278 = scalar_lea.sflag [#allocation4], %s277
        %s279 = sand.u32 %s53, 1
        %s280 = smul.addr %s279, 16
        %s281 = scalar_lea.vmem [#allocation3], %s280
        %p282 = pneg %p66
        %p283 = pneg %p63
        %s284 = sand.u32 %s24, 1
        %s285 = scalar_lea.sflag [#allocation7], %s284
        %s286 = sand.u32 %s83, 1
        %s287 = smul.addr %s286, 16
        %s288 = scalar_lea.vmem [#allocation6], %s287
        %p289 = pneg %p96
        %p290 = pneg %p93
        %p291 = pneg %p117
        %p292 = pneg %p114
        %p293 = pneg %p138
        %p294 = pneg %p135
        %p295 = pneg %p166
        %p296 = pneg %p163
        %s297 = sand.u32 %s153, 1
        %s298 = scalar_lea.sflag [#allocation5], %s297
        %s299 = sand.u32 %s153, 1
        %s300 = smul.addr %s299, 16
        %s301 = scalar_lea.vmem [#allocation9], %s300
        %s302 = smul.u32 2, %s31
        %s303 = smul.u32 2, %s30
        %s304 = smul.u32 2, %s30
        %p305 = scmp.eq.s32.totalorder %s31, 0
        // Predicated region
        $region49: #{tpu_custom_call.1} parent=35 // pred_check
          %p306 = pneg %p305
        $region50: #{tpu_custom_call.1} parent=35 // pred_check_branch
          %308 = sbr.rel (%p306) target = $region52
        $region51: #{tpu_custom_call.1} parent=35 // pred_region
          %309 = vst [vmem:[#allocation2] sm:$0xff] 0.0
          %310 = vst [vmem:[#allocation2 + $0x8] sm:$0xff] 0.0
        $region52: #{tpu_custom_call.1} parent=35 // pred_fallthru
          _
        %v311 = vld [vmem:[%s259] sm:$0xff]
        %v312 = vld [vmem:[%s259 + $0x8] sm:$0xff]
        %v313 = vld [vmem:[#allocation8] sm:$0xff]
        %v314 = vld [vmem:[#allocation8 + $0x8] sm:$0xff]
        %v315 = vld [vmem:[#allocation8 + $0x10] sm:$0xff]
        %v316 = vld [vmem:[#allocation8 + $0x18] sm:$0xff]
        %v317 = vld [vmem:[#allocation8 + $0x20] sm:$0xff]
        %v318 = vld [vmem:[#allocation8 + $0x28] sm:$0xff]
        %v319 = vld [vmem:[#allocation8 + $0x30] sm:$0xff]
        %v320 = vld [vmem:[#allocation8 + $0x38] sm:$0xff]
        %v321 = vld [vmem:[#allocation8 + $0x40] sm:$0xff]
        %v322 = vld [vmem:[#allocation8 + $0x48] sm:$0xff]
        %v323 = vld [vmem:[#allocation8 + $0x50] sm:$0xff]
        %v324 = vld [vmem:[#allocation8 + $0x58] sm:$0xff]
        %v325 = vld [vmem:[#allocation8 + $0x60] sm:$0xff]
        %v326 = vld [vmem:[#allocation8 + $0x68] sm:$0xff]
        %v327 = vld [vmem:[#allocation8 + $0x70] sm:$0xff]
        %v328 = vld [vmem:[#allocation8 + $0x78] sm:$0xff]
        %329 = vmatprep.subr.mxu0 0.0
        %330 = vmatpush1.msra.mxu0 %v313
        %331 = vmatprep.subr.mxu0 0.0
        %332 = vmatpush1.msra.mxu0 %v314
        %333 = vmatprep.subr.mxu0 0.0
        %334 = vmatpush1.msra.mxu0 %v315
        %335 = vmatprep.subr.mxu0 0.0
        %336 = vmatpush1.msra.mxu0 %v316
        %337 = vmatprep.subr.mxu0 0.0
        %338 = vmatpush1.msra.mxu0 %v317
        %339 = vmatprep.subr.mxu0 0.0
        %340 = vmatpush1.msra.mxu0 %v318
        %341 = vmatprep.subr.mxu0 0.0
        %342 = vmatpush1.msra.mxu0 %v319
        %343 = vmatprep.subr.mxu0 0.0
        %344 = vmatpush1.msra.mxu0 %v320
        %345 = vmatprep.subr.mxu0 0.0
        %346 = vmatpush1.msra.mxu0 %v321
        %347 = vmatprep.subr.mxu0 0.0
        %348 = vmatpush1.msra.mxu0 %v322
        %349 = vmatprep.subr.mxu0 0.0
        %350 = vmatpush1.msra.mxu0 %v323
        %351 = vmatprep.subr.mxu0 0.0
        %352 = vmatpush1.msra.mxu0 %v324
        %353 = vmatprep.subr.mxu0 0.0
        %354 = vmatpush1.msra.mxu0 %v325
        %355 = vmatprep.subr.mxu0 0.0
        %356 = vmatpush1.msra.mxu0 %v326
        %357 = vmatprep.subr.mxu0 0.0
        %358 = vmatpush1.msra.mxu0 %v327
        %359 = vmatprep.subr.mxu0 0.0
        %360 = vmatpush1.msra.mxu0 %v328
        %361 = vmatprep.subr.mxu0 0.0
        %362 = vmatpush1.msra.mxu0 0.0
        %363 = vmatprep.subr.mxu0 0.0
        %364 = vmatpush1.msra.mxu0 0.0
        %365 = vmatprep.subr.mxu0 0.0
        %366 = vmatpush1.msra.mxu0 0.0
        %367 = vmatprep.subr.mxu0 0.0
        %368 = vmatpush1.msra.mxu0 0.0
        %369 = vmatprep.subr.mxu0 0.0
        %370 = vmatpush1.msra.mxu0 0.0
        %371 = vmatprep.subr.mxu0 0.0
        %372 = vmatpush1.msra.mxu0 0.0
        %373 = vmatprep.subr.mxu0 0.0
        %374 = vmatpush1.msra.mxu0 0.0
        %375 = vmatprep.subr.mxu0 0.0
        %376 = vmatpush1.msra.mxu0 0.0
        %377 = vmatprep.subr.mxu0 0.0
        %378 = vmatpush1.msra.mxu0 0.0
        %379 = vmatprep.subr.mxu0 0.0
        %380 = vmatpush1.msra.mxu0 0.0
        %381 = vmatprep.subr.mxu0 0.0
        %382 = vmatpush1.msra.mxu0 0.0
        %383 = vmatprep.subr.mxu0 0.0
        %384 = vmatpush1.msra.mxu0 0.0
        %385 = vmatprep.subr.mxu0 0.0
        %386 = vmatpush1.msra.mxu0 0.0
        %387 = vmatprep.subr.mxu0 0.0
        %388 = vmatpush1.msra.mxu0 0.0
        %389 = vmatprep.subr.mxu0 0.0
        %390 = vmatpush1.msra.mxu0 0.0
        %391 = vmatprep.subr.mxu0 0.0
        %392 = vmatpush1.msra.mxu0 0.0
        %393 = vmatprep.mubr.f32.mxu0 0.0
        %394 = vmatmul.mubr.f32.gmra.mrb[0].mxu0 %v311
        %v395 = vpop.f32.mrb[0].mxu0
        %v396 = vadd.f32 0.0, %v395
        %v397 = vpop.f32.mrb[0].mxu0
        %398 = vmatprep.mubr.f32.mxu0 0.0
        %399 = vmatmul.mubr.f32.gmra.mrb[0].mxu0 %v312
        %v400 = vpop.f32.mrb[0].mxu0
        %v401 = vadd.f32 0.0, %v400
        %v402 = vpop.f32.mrb[0].mxu0
        %403 = vdwg.mxu0
        %v404 = vld [vmem:[#allocation2] sm:$0xff]
        %v405 = vld [vmem:[#allocation2 + $0x8] sm:$0xff]
        %v406 = vld [vmem:[%s268] sm:$0xff]
        %v407 = vld [vmem:[%s268 + $0x8] sm:$0xff]
        %vm408 = vcmask 130048
        %v410 = vsel %vm408, %v406, 0
        %v413 = vsel %vm408, %v407, 0
        %415 = vmatprep.subr.mxu0 0.0
        %416 = vmatpush1.msra.mxu0 %v396
        %417 = vmatprep.subr.mxu0 0.0
        %418 = vmatpush1.msra.mxu0 %v401
        %419 = vmatprep.subr.mxu0 0.0
        %420 = vmatpush1.msra.mxu0 0.0
        %421 = vmatprep.subr.mxu0 0.0
        %422 = vmatpush1.msra.mxu0 0.0
        %423 = vmatprep.subr.mxu0 0.0
        %424 = vmatpush1.msra.mxu0 0.0
        %425 = vmatprep.subr.mxu0 0.0
        %426 = vmatpush1.msra.mxu0 0.0
        %427 = vmatprep.subr.mxu0 0.0
        %428 = vmatpush1.msra.mxu0 0.0
        %429 = vmatprep.subr.mxu0 0.0
        %430 = vmatpush1.msra.mxu0 0.0
        %431 = vmatprep.subr.mxu0 0.0
        %432 = vmatpush1.msra.mxu0 0.0
        %433 = vmatprep.subr.mxu0 0.0
        %434 = vmatpush1.msra.mxu0 0.0
        %435 = vmatprep.subr.mxu0 0.0
        %436 = vmatpush1.msra.mxu0 0.0
        %437 = vmatprep.subr.mxu0 0.0
        %438 = vmatpush1.msra.mxu0 0.0
        %439 = vmatprep.subr.mxu0 0.0
        %440 = vmatpush1.msra.mxu0 0.0
        %441 = vmatprep.subr.mxu0 0.0
        %442 = vmatpush1.msra.mxu0 0.0
        %443 = vmatprep.subr.mxu0 0.0
        %444 = vmatpush1.msra.mxu0 0.0
        %445 = vmatprep.subr.mxu0 0.0
        %446 = vmatpush1.msra.mxu0 0.0
        %447 = vmatprep.subr.mxu0 0.0
        %448 = vmatpush1.msra.mxu0 0.0
        %449 = vmatprep.subr.mxu0 0.0
        %450 = vmatpush1.msra.mxu0 0.0
        %451 = vmatprep.subr.mxu0 0.0
        %452 = vmatpush1.msra.mxu0 0.0
        %453 = vmatprep.subr.mxu0 0.0
        %454 = vmatpush1.msra.mxu0 0.0
        %455 = vmatprep.subr.mxu0 0.0
        %456 = vmatpush1.msra.mxu0 0.0
        %457 = vmatprep.subr.mxu0 0.0
        %458 = vmatpush1.msra.mxu0 0.0
        %459 = vmatprep.subr.mxu0 0.0
        %460 = vmatpush1.msra.mxu0 0.0
        %461 = vmatprep.subr.mxu0 0.0
        %462 = vmatpush1.msra.mxu0 0.0
        %463 = vmatprep.subr.mxu0 0.0
        %464 = vmatpush1.msra.mxu0 0.0
        %465 = vmatprep.subr.mxu0 0.0
        %466 = vmatpush1.msra.mxu0 0.0
        %467 = vmatprep.subr.mxu0 0.0
        %468 = vmatpush1.msra.mxu0 0.0
        %469 = vmatprep.subr.mxu0 0.0
        %470 = vmatpush1.msra.mxu0 0.0
        %471 = vmatprep.subr.mxu0 0.0
        %472 = vmatpush1.msra.mxu0 0.0
        %473 = vmatprep.subr.mxu0 0.0
        %474 = vmatpush1.msra.mxu0 0.0
        %475 = vmatprep.subr.mxu0 0.0
        %476 = vmatpush1.msra.mxu0 0.0
        %477 = vmatprep.subr.mxu0 0.0
        %478 = vmatpush1.msra.mxu0 0.0
        %479 = vmatprep.mubr.f32.mxu0 0.0
        %480 = vmatmul.mubr.f32.gmra.mrb[0].mxu0 %v410
        %v481 = vpop.f32.mrb[0].mxu0
        %v482 = vadd.f32 0.0, %v481
        %v483 = vpop.f32.mrb[0].mxu0
        %484 = vmatprep.mubr.f32.mxu0 0.0
        %485 = vmatmul.mubr.f32.gmra.mrb[0].mxu0 %v413
        %v486 = vpop.f32.mrb[0].mxu0
        %v487 = vadd.f32 0.0, %v486
        %v488 = vpop.f32.mrb[0].mxu0
        %489 = vdwg.mxu0
        %v490 = vadd.f32 %v404, %v482
        %v491 = vadd.f32 %v405, %v487
        %492 = vst [vmem:[#allocation2] sm:$0xff] %v490
        %493 = vst [vmem:[#allocation2 + $0x8] sm:$0xff] %v491
        // Predicated region
        $region53: #{tpu_custom_call.1} parent=35 // pred_check
          %p494 = pneg %p305
        $region54: #{tpu_custom_call.1} parent=35 // pred_check_branch
          %496 = sbr.rel (%p494) target = $region56
        $region55: #{tpu_custom_call.1} parent=35 // pred_region
          %v497 = vld [vmem:[#allocation2] sm:$0xff]
          %v498 = vld [vmem:[#allocation2 + $0x8] sm:$0xff]
          %v499 = vld [vmem:[%s3] sm:$0x1]
          %v501 = vlaneseq
          %v502 = vshrl.u32 %v501, 7
          %v503 = vsub.s32 0, %v502
          %v504 = vrot.slane %v499, %v503
          %v506 = vadd.f32 %v497, %v504
          %v507 = vadd.f32 %v498, %v504
          %508 = vst [vmem:[%s301] sm:$0xff] %v506
          %509 = vst [vmem:[%s301 + $0x8] sm:$0xff] %v507
        $region56: #{tpu_custom_call.1} parent=35 // pred_fallthru
          _
        %s510 = sand.u32 %s153, 1
        %s511 = scalar_lea.sflag [#allocation5], %s510
        %s512 = sand.u32 %s153, 1
        %s513 = smul.addr %s512, 16
        %s514 = scalar_lea.vmem [#allocation9], %s513
        // Predicated region
        $region57: #{tpu_custom_call.1} parent=35 // pred_check
          %p515 = pneg %p163
        $region58: #{tpu_custom_call.1} parent=35 // pred_check_branch
          %517 = sbr.rel (%p515) target = $region60
        $region59: #{tpu_custom_call.1} parent=35 // pred_region
          %s518 = smul.u32 2, %s30
          %s520 = ssub.s32 256, 256
          %521 = vsyncadd %s511, %s520
          %s522 = smul.addr %s29, 2
          %s523 = sadd.s32 %s518, %s522
          %s524 = smul.addr %s523, 128
          %s525 = scalar_lea.hbm %s4, %s524
          %s526 = sshll.u32 %s514, 4
          %s527 = int_to_ptr.vmem [resolvable:$true] %s526
          %532 = dma.vmem_to_hbm [thread:$0]  %s527, 256, %s525, %s511, 128, 128, 8
        $region60: #{tpu_custom_call.1} parent=35 // pred_fallthru
          _
      $region36: #{tpu_custom_call.1} parent=5 // pred_fallthru
        _
      %p533 = scmp.le.s32.totalorder 2, %s19
      // Predicated region
      $region61: #{tpu_custom_call.1} parent=5 // pred_check
        %p534 = pneg %p533
      $region62: #{tpu_custom_call.1} parent=5 // pred_check_branch
        %536 = sbr.rel (%p534) target = $region64
      $region63: #{tpu_custom_call.1} parent=5 // pred_region
        %s537 = ssub.s32 %s19, 2
        // Predicated region
        $region65: #{tpu_custom_call.1} parent=63 // pred_check
          %p538 = pneg %p169
        $region66: #{tpu_custom_call.1} parent=63 // pred_check_branch
          %540 = sbr.rel (%p538) target = $region68
        $region67: #{tpu_custom_call.1} parent=63 // pred_region
          %s541 = sand.u32 %s154, 1
          %s542 = scalar_lea.sflag [#allocation5], %s541
          %s543 = sand.u32 %s154, 1
          %s544 = smul.addr %s543, 16
          %s545 = scalar_lea.vmem [#allocation9], %s544
          %546 = dma.done %s542, 256
        $region68: #{tpu_custom_call.1} parent=63 // pred_fallthru
          _
      $region64: #{tpu_custom_call.1} parent=5 // pred_fallthru
        _
    $region6: #{tpu_custom_call.1} parent=1 // loop_footer
      %s23 = sadd.s32 1, %s19
    $region7: #{tpu_custom_call.1} parent=1 // loop_footer_branch
      %18 = sbr.rel target = $region3
    $region8: #{tpu_custom_call.1} parent=1 // loop_exit
      _
    %547 = vsyncpa [#allocation4], 1
    %s548 = scalar_lea.sflag [#allocation4], 1
    %549 = vsyncpa %s548, 1
    %550 = vsyncpa [#allocation7], 1
    %s551 = scalar_lea.sflag [#allocation7], 1
    %552 = vsyncpa %s551, 1
    %553 = vsyncpa [#allocation5], 1
    %s554 = scalar_lea.sflag [#allocation5], 1
    %555 = vsyncpa %s554, 1

// kernel: tpu_custom_call.1
$region0: #{tpu_custom_call.1}
  #allocation0 [shape = 'u32[]', space=smem, size = 0x4, offset = 0x4, fixed_abs, tag = 'smem constant byte address 0x4 - core index']
  #allocation1 [shape = 'u32[144,128]{1,0:T(1,128)}', space=vmem, size = 0x12000, scoped, tag = 'internal scratch']
  #allocation2 [shape = 'f32[16,128]{1,0:T(8,128)}', space=vmem, size = 0x2000, scoped, tag = 'scratch operand']
  %s0 = inlined_call_operand.hbm [shape: f32[2,16,128], index: 0, kind: input, shape index: {}]
  %s1 = inlined_call_operand.hbm [shape: f32[2,16,16], index: 1, kind: input, shape index: {}]
  %s2 = inlined_call_operand.hbm [shape: f32[128,128], index: 2, kind: input, shape index: {}]
  %s3 = inlined_call_operand.vmem [shape: f32[1,128], index: 3, kind: input, shape index: {}]
  %s4 = inlined_call_operand.hbm [shape: f32[2,16,128], index: 4, kind: output, shape index: {}]
  %s5 = sld [smem:[#allocation0]]
  $region69: #{tpu_custom_call.1} parent=0
    _
  %s7 = ssub.s32 1, %s5
  %s8 = scalar_select 0, %s7, %s5
  $region1: #{tpu_custom_call.1} parent=0
    #allocation3 [shape = 'u8[16384]{0}', space=vmem, size = 0x4000, scoped, tag = 'input window, operand 0']
    #allocation4 [shape = 's32[2]{0}', space=sflag, size = 0x8, scoped, tag = 'scoped memory for tpu_custom_call.1']
    #allocation5 [shape = 's32[2]{0}', space=sflag, size = 0x8, scoped, tag = 'scoped memory for tpu_custom_call.1']
    #allocation6 [shape = 'u8[16384]{0}', space=vmem, size = 0x4000, scoped, tag = 'input window, operand 1']
    #allocation7 [shape = 's32[2]{0}', space=sflag, size = 0x8, scoped, tag = 'scoped memory for tpu_custom_call.1']
    #allocation8 [shape = 'u8[65536]{0}', space=vmem, size = 0x10000, scoped, tag = 'input window, operand 2, single buffered']
    #allocation9 [shape = 'u8[16384]{0}', space=vmem, size = 0x4000, scoped, tag = 'output window, operand 0']
    %9 = vsyncpa [#allocation4], 0
    %s10 = scalar_lea.sflag [#allocation4], 1
    %11 = vsyncpa %s10, 0
    %12 = vsyncpa [#allocation7], 0
    %s13 = scalar_lea.sflag [#allocation7], 1
    %14 = vsyncpa %s13, 0
    %15 = vsyncpa [#allocation5], 0
    %s16 = scalar_lea.sflag [#allocation5], 1
    %17 = vsyncpa %s16, 0
    loop: start=0, step=1, limit=4
    $region2: #{tpu_custom_call.1} parent=1 // loop_pre_header
      _
    $region3: #{tpu_custom_call.1} parent=1 // loop_header
      %s19 = sphi 0, %s23
      %p20 = scmp.ge.s32.totalorder %s19, 4
      %s26 = sphi 0, %s45
      %s27 = sphi 0, %s41
      %s28 = sphi 0, %s37
      %s29 = sphi 0, %s26
      %s30 = sphi 0, %s27
      %s31 = sphi 0, %s28
      %s32 = sphi 0, %s29
      %s33 = sphi 0, %s30
      %s34 = sphi 0, %s31
      %s50 = sphi 0, %s52
      %s53 = sphi 0, %s50
      %s54 = sphi 0, %s53
      %s70 = sphi 0, %s54
      %s80 = sphi 0, %s82
      %s83 = sphi 0, %s80
      %s84 = sphi 0, %s83
      %s100 = sphi 0, %s84
      %s104 = sphi 0, %s104
      %s106 = sphi 0, %s104
      %s107 = sphi 0, %s106
      %s121 = sphi 0, %s107
      %s125 = sphi 0, %s125
      %s127 = sphi 0, %s125
      %s128 = sphi 0, %s127
      %s142 = sphi 0, %s128
      %s150 = sphi 0, %s152
      %s153 = sphi 0, %s150
      %s154 = sphi 0, %s153
      %s170 = sphi 0, %s154
    $region4: #{tpu_custom_call.1} parent=1 // loop_header_branch
      %22 = sbr.rel (%p20) target = $region8
    $region5: #{tpu_custom_call.1} parent=1 // loop_body
      %s24 = ssub.s32 %s19, 1
      %s25 = ssub.s32 %s19, 2
      %s35 = sadd.s32 1, %s28
      %p36 = scmp.ge.s32.totalorder %s35, 1
      %s37 = scalar_select %p36, 0, %s35
      %s38 = sadd.s32 1, %s27
      %s39 = scalar_select %p36, %s38, %s27
      %p40 = scmp.ge.s32.totalorder %s39, 1
      %s41 = scalar_select %p40, 0, %s39
      %s42 = sadd.s32 1, %s26
      %s43 = scalar_select %p40, %s42, %s26
      %p44 = scmp.ge.s32.totalorder %s43, 2
      %s45 = scalar_select %p44, 0, %s43
      %s46 = ssub.s32 %s26, %s45
      %s47 = ssub.s32 %s28, %s37
      %s48 = sor.u32 %s46, %s47
      %p49 = scmp.eq.s32.totalorder %s48, 0
      %s51 = sadd.s32 %s50, 1
      %s52 = scalar_select %p49, %s50, %s51
      %p55 = pneg %p49
      %p56 = scmp.eq.s32.totalorder %s19, 1
      %p57 = por %p55, %p56
      %p58 = scmp.ne.s32.totalorder %s50, %s53
      %p59 = scmp.eq.s32.totalorder %s19, 0
      %p60 = por %p58, %p59
      %p61 = scmp.ne.s32.totalorder %s50, %s53
      %p62 = scmp.eq.s32.totalorder %s24, 1
      %p63 = por %p61, %p62
      %p64 = scmp.ne.s32.totalorder %s53, %s54
      %p65 = scmp.eq.s32.totalorder %s24, 0
      %p66 = por %p64, %p65
      %p67 = scmp.ne.s32.totalorder %s53, %s54
      %p68 = scmp.eq.s32.totalorder %s25, 1
      %p69 = por %p67, %p68
      %p71 = scmp.ne.s32.totalorder %s54, %s70
      %p72 = scmp.eq.s32.totalorder %s25, 0
      %p73 = por %p71, %p72
      %s74 = ssub.s32 %s26, %s45
      %s75 = ssub.s32 %s27, %s41
      %s76 = sor.u32 %s74, %s75
      %s77 = ssub.s32 %s28, %s37
      %s78 = sor.u32 %s76, %s77
      %p79 = scmp.eq.s32.totalorder %s78, 0
      %s81 = sadd.s32 %s80, 1
      %s82 = scalar_select %p79, %s80, %s81
      %p85 = pneg %p79
      %p86 = scmp.eq.s32.totalorder %s19, 1
      %p87 = por %p85, %p86
      %p88 = scmp.ne.s32.totalorder %s80, %s83
      %p89 = scmp.eq.s32.totalorder %s19, 0
      %p90 = por %p88, %p89
      %p91 = scmp.ne.s32.totalorder %s80, %s83
      %p92 = scmp.eq.s32.totalorder %s24, 1
      %p93 = por %p91, %p92
      %p94 = scmp.ne.s32.totalorder %s83, %s84
      %p95 = scmp.eq.s32.totalorder %s24, 0
      %p96 = por %p94, %p95
      %p97 = scmp.ne.s32.totalorder %s83, %s84
      %p98 = scmp.eq.s32.totalorder %s25, 1
      %p99 = por %p97, %p98
      %p101 = scmp.ne.s32.totalorder %s84, %s100
      %p102 = scmp.eq.s32.totalorder %s25, 0
      %p103 = por %p101, %p102
      %s105 = sadd.s32 %s104, 1
      %p108 = scmp.eq.s32.totalorder %s19, 1
      %p109 = scmp.ne.s32.totalorder %s104, %s106
      %p110 = scmp.eq.s32.totalorder %s19, 0
      %p111 = por %p109, %p110
      %p112 = scmp.ne.s32.totalorder %s104, %s106
      %p113 = scmp.eq.s32.totalorder %s24, 1
      %p114 = por %p112, %p113
      %p115 = scmp.ne.s32.totalorder %s106, %s107
      %p116 = scmp.eq.s32.totalorder %s24, 0
      %p117 = por %p115, %p116
      %p118 = scmp.ne.s32.totalorder %s106, %s107
      %p119 = scmp.eq.s32.totalorder %s25, 1
      %p120 = por %p118, %p119
      %p122 = scmp.ne.s32.totalorder %s107, %s121
      %p123 = scmp.eq.s32.totalorder %s25, 0
      %p124 = por %p122, %p123
      %s126 = sadd.s32 %s125, 1
      %p129 = scmp.eq.s32.totalorder %s19, 1
      %p130 = scmp.ne.s32.totalorder %s125, %s127
      %p131 = scmp.eq.s32.totalorder %s19, 0
      %p132 = por %p130, %p131
      %p133 = scmp.ne.s32.totalorder %s125, %s127
      %p134 = scmp.eq.s32.totalorder %s24, 1
      %p135 = por %p133, %p134
      %p136 = scmp.ne.s32.totalorder %s127, %s128
      %p137 = scmp.eq.s32.totalorder %s24, 0
      %p138 = por %p136, %p137
      %p139 = scmp.ne.s32.totalorder %s127, %s128
      %p140 = scmp.eq.s32.totalorder %s25, 1
      %p141 = por %p139, %p140
      %p143 = scmp.ne.s32.totalorder %s128, %s142
      %p144 = scmp.eq.s32.totalorder %s25, 0
      %p145 = por %p143, %p144
      %s146 = ssub.s32 %s26, %s45
      %s147 = ssub.s32 %s27, %s41
      %s148 = sor.u32 %s146, %s147
      %p149 = scmp.eq.s32.totalorder %s148, 0
      %s151 = sadd.s32 %s150, 1
      %s152 = scalar_select %p149, %s150, %s151
      %p155 = pneg %p149
      %p156 = scmp.eq.s32.totalorder %s19, 1
      %p157 = por %p155, %p156
      %p158 = scmp.ne.s32.totalorder %s150, %s153
      %p159 = scmp.eq.s32.totalorder %s19, 0
      %p160 = por %p158, %p159
      %p161 = scmp.ne.s32.totalorder %s150, %s153
      %p162 = scmp.eq.s32.totalorder %s24, 1
      %p163 = por %p161, %p162
      %p164 = scmp.ne.s32.totalorder %s153, %s154
      %p165 = scmp.eq.s32.totalorder %s24, 0
      %p166 = por %p164, %p165
      %p167 = scmp.ne.s32.totalorder %s153, %s154
      %p168 = scmp.eq.s32.totalorder %s25, 1
      %p169 = por %p167, %p168
      %p171 = scmp.ne.s32.totalorder %s154, %s170
      %p172 = scmp.eq.s32.totalorder %s25, 0
      %p173 = por %p171, %p172
      %p174 = scmp.le.s32.totalorder 1, %s19
      %p175 = scmp.lt.s32.totalorder %s19, 3
      %p176 = pnand %p174, %p175
      %p177 = pneg %p176
      // Predicated region
      $region9: #{tpu_custom_call.1} parent=5 // pred_check
        _
      $region10: #{tpu_custom_call.1} parent=5 // pred_check_branch
        %179 = sbr.rel (%p176) target = $region12
      $region11: #{tpu_custom_call.1} parent=5 // pred_region
        %s180 = ssub.s32 %s19, 1
        // Predicated region
        $region13: #{tpu_custom_call.1} parent=11 // pred_check
          %p181 = pneg %p117
        $region14: #{tpu_custom_call.1} parent=11 // pred_check_branch
          %183 = sbr.rel (%p181) target = $region16
        $region15: #{tpu_custom_call.1} parent=11 // pred_region
          %s185 = ssub.s32 2048, 2048
          %186 = vsyncadd [#allocation7], %s185
          %s187 = sshll.u32 [#allocation8], 4
          %s188 = int_to_ptr.vmem [resolvable:$true] %s187
          %193 = dma.hbm_to_vmem [thread:$0]  %s2, 2048, %s188, [#allocation7], 128, 128, 8
        $region16: #{tpu_custom_call.1} parent=11 // pred_fallthru
          _
        // Predicated region
        $region17: #{tpu_custom_call.1} parent=11 // pred_check
          %p194 = pneg %p138
        $region18: #{tpu_custom_call.1} parent=11 // pred_check_branch
          %196 = sbr.rel (%p194) target = $region20
        $region19: #{tpu_custom_call.1} parent=11 // pred_region
          _
        $region20: #{tpu_custom_call.1} parent=11 // pred_fallthru
          _
      $region12: #{tpu_custom_call.1} parent=5 // pred_fallthru
        _
      %p197 = scmp.lt.s32.totalorder %s19, 2
      // Predicated region
      $region21: #{tpu_custom_call.1} parent=5 // pred_check
        %p198 = pneg %p197
      $region22: #{tpu_custom_call.1} parent=5 // pred_check_branch
        %200 = sbr.rel (%p198) target = $region24
      $region23: #{tpu_custom_call.1} parent=5 // pred_region
        // Predicated region
        $region25: #{tpu_custom_call.1} parent=23 // pred_check
          %p201 = pneg %p60
        $region26: #{tpu_custom_call.1} parent=23 // pred_check_branch
          %203 = sbr.rel (%p201) target = $region28
        $region27: #{tpu_custom_call.1} parent=23 // pred_region
          %s204 = sand.u32 %s50, 1
          %s205 = scalar_lea.sflag [#allocation4], %s204
          %s206 = sand.u32 %s50, 1
          %s207 = smul.addr %s206, 16
          %s208 = scalar_lea.vmem [#allocation3], %s207
          %s209 = smul.u32 2, %s28
          %s211 = ssub.s32 256, 256
          %212 = vsyncadd %s205, %s211
          %s213 = smul.addr %s26, 2
          %s214 = sadd.s32 %s209, %s213
          %s215 = smul.addr %s214, 128
          %s216 = scalar_lea.hbm %s0, %s215
          %s217 = sshll.u32 %s208, 4
          %s218 = int_to_ptr.vmem [resolvable:$true] %s217
          %223 = dma.hbm_to_vmem [thread:$0]  %s216, 256, %s218, %s205, 128, 128, 8
        $region28: #{tpu_custom_call.1} parent=23 // pred_fallthru
          _
        // Predicated region
        $region29: #{tpu_custom_call.1} parent=23 // pred_check
          %p224 = pneg %p90
        $region30: #{tpu_custom_call.1} parent=23 // pred_check_branch
          %226 = sbr.rel (%p224) target = $region32
        $region31: #{tpu_custom_call.1} parent=23 // pred_region
          %s227 = sand.u32 %s19, 1
          %s228 = scalar_lea.sflag [#allocation7], %s227
          %s229 = sand.u32 %s80, 1
          %s230 = smul.addr %s229, 16
          %s231 = scalar_lea.vmem [#allocation6], %s230
          %s232 = smul.u32 2, %s27
          %s234 = ssub.s32 256, 256
          %235 = vsyncadd %s228, %s234
          %s236 = sadd.s32 %s28, %s232
          %s237 = smul.addr %s26, 2
          %s238 = sadd.s32 %s236, %s237
          %s239 = smul.addr %s238, 128
          %s240 = scalar_lea.hbm %s1, %s239
          %s241 = sshll.u32 %s231, 4
          %s242 = int_to_ptr.vmem [resolvable:$true] %s241
          %247 = dma.hbm_to_vmem [thread:$0]  %s240, 256, %s242, %s228, 128, 128, 8
        $region32: #{tpu_custom_call.1} parent=23 // pred_fallthru
          _
      $region24: #{tpu_custom_call.1} parent=5 // pred_fallthru
        _
      %p248 = scmp.le.s32.totalorder 1, %s19
      %p249 = scmp.lt.s32.totalorder %s19, 3
      %p250 = pnand %p248, %p249
      %p251 = pneg %p250
      // Predicated region
      $region33: #{tpu_custom_call.1} parent=5 // pred_check
        _
      $region34: #{tpu_custom_call.1} parent=5 // pred_check_branch
        %253 = sbr.rel (%p250) target = $region36
      $region35: #{tpu_custom_call.1} parent=5 // pred_region
        %s254 = ssub.s32 %s19, 1
        %s255 = sand.u32 %s53, 1
        %s256 = scalar_lea.sflag [#allocation4], %s255
        %s257 = sand.u32 %s53, 1
        %s258 = smul.addr %s257, 16
        %s259 = scalar_lea.vmem [#allocation3], %s258
        // Predicated region
        $region37: #{tpu_custom_call.1} parent=35 // pred_check
          %p260 = pneg %p66
        $region38: #{tpu_custom_call.1} parent=35 // pred_check_branch
          %262 = sbr.rel (%p260) target = $region40
        $region39: #{tpu_custom_call.1} parent=35 // pred_region
          %263 = dma.done %s256, 256
        $region40: #{tpu_custom_call.1} parent=35 // pred_fallthru
          _
        %s264 = sand.u32 %s24, 1
        %s265 = scalar_lea.sflag [#allocation7], %s264
        %s266 = sand.u32 %s83, 1
        %s267 = smul.addr %s266, 16
        %s268 = scalar_lea.vmem [#allocation6], %s267
        // Predicated region
        $region41: #{tpu_custom_call.1} parent=35 // pred_check
          %p269 = pneg %p96
        $region42: #{tpu_custom_call.1} parent=35 // pred_check_branch
          %271 = sbr.rel (%p269) target = $region44
        $region43: #{tpu_custom_call.1} parent=35 // pred_region
          %272 = dma.done %s265, 256
        $region44: #{tpu_custom_call.1} parent=35 // pred_fallthru
          _
        // Predicated region
        $region45: #{tpu_custom_call.1} parent=35 // pred_check
          %p273 = pneg %p117
        $region46: #{tpu_custom_call.1} parent=35 // pred_check_branch
          %275 = sbr.rel (%p273) target = $region48
        $region47: #{tpu_custom_call.1} parent=35 // pred_region
          %276 = dma.done [#allocation7], 2048
        $region48: #{tpu_custom_call.1} parent=35 // pred_fallthru
          _
        %s277 = sand.u32 %s53, 1
        %s278 = scalar_lea.sflag [#allocation4], %s277
        %s279 = sand.u32 %s53, 1
        %s280 = smul.addr %s279, 16
        %s281 = scalar_lea.vmem [#allocation3], %s280
        %p282 = pneg %p66
        %p283 = pneg %p63
        %s284 = sand.u32 %s24, 1
        %s285 = scalar_lea.sflag [#allocation7], %s284
        %s286 = sand.u32 %s83, 1
        %s287 = smul.addr %s286, 16
        %s288 = scalar_lea.vmem [#allocation6], %s287
        %p289 = pneg %p96
        %p290 = pneg %p93
        %p291 = pneg %p117
        %p292 = pneg %p114
        %p293 = pneg %p138
        %p294 = pneg %p135
        %p295 = pneg %p166
        %p296 = pneg %p163
        %s297 = sand.u32 %s153, 1
        %s298 = scalar_lea.sflag [#allocation5], %s297
        %s299 = sand.u32 %s153, 1
        %s300 = smul.addr %s299, 16
        %s301 = scalar_lea.vmem [#allocation9], %s300
        %s302 = smul.u32 2, %s31
        %s303 = smul.u32 2, %s30
        %s304 = smul.u32 2, %s30
        %p305 = scmp.eq.s32.totalorder %s31, 0
        // Predicated region
        $region49: #{tpu_custom_call.1} parent=35 // pred_check
          %p306 = pneg %p305
        $region50: #{tpu_custom_call.1} parent=35 // pred_check_branch
          %308 = sbr.rel (%p306) target = $region52
        $region51: #{tpu_custom_call.1} parent=35 // pred_region
          %309 = vst [vmem:[#allocation2] sm:$0xff] 0.0
          %310 = vst [vmem:[#allocation2 + $0x8] sm:$0xff] 0.0
        $region52: #{tpu_custom_call.1} parent=35 // pred_fallthru
          _
        %v311 = vld [vmem:[%s259] sm:$0xff]
        %v312 = vld [vmem:[%s259 + $0x8] sm:$0xff]
        %v313 = vld [vmem:[#allocation8] sm:$0xff]
        %v314 = vld [vmem:[#allocation8 + $0x8] sm:$0xff]
        %v315 = vld [vmem:[#allocation8 + $0x10] sm:$0xff]
        %v316 = vld [vmem:[#allocation8 + $0x18] sm:$0xff]
        %v317 = vld [vmem:[#allocation8 + $0x20] sm:$0xff]
        %v318 = vld [vmem:[#allocation8 + $0x28] sm:$0xff]
        %v319 = vld [vmem:[#allocation8 + $0x30] sm:$0xff]
        %v320 = vld [vmem:[#allocation8 + $0x38] sm:$0xff]
        %v321 = vld [vmem:[#allocation8 + $0x40] sm:$0xff]
        %v322 = vld [vmem:[#allocation8 + $0x48] sm:$0xff]
        %v323 = vld [vmem:[#allocation8 + $0x50] sm:$0xff]
        %v324 = vld [vmem:[#allocation8 + $0x58] sm:$0xff]
        %v325 = vld [vmem:[#allocation8 + $0x60] sm:$0xff]
        %v326 = vld [vmem:[#allocation8 + $0x68] sm:$0xff]
        %v327 = vld [vmem:[#allocation8 + $0x70] sm:$0xff]
        %v328 = vld [vmem:[#allocation8 + $0x78] sm:$0xff]
        %329 = vmatprep.subr.mxu0 0.0
        %330 = vmatpush1.msra.mxu0 %v313
        %331 = vmatprep.subr.mxu0 0.0
        %332 = vmatpush1.msra.mxu0 %v314
        %333 = vmatprep.subr.mxu0 0.0
        %334 = vmatpush1.msra.mxu0 %v315
        %335 = vmatprep.subr.mxu0 0.0
        %336 = vmatpush1.msra.mxu0 %v316
        %337 = vmatprep.subr.mxu0 0.0
        %338 = vmatpush1.msra.mxu0 %v317
        %339 = vmatprep.subr.mxu0 0.0
        %340 = vmatpush1.msra.mxu0 %v318
        %341 = vmatprep.subr.mxu0 0.0
        %342 = vmatpush1.msra.mxu0 %v319
        %343 = vmatprep.subr.mxu0 0.0
        %344 = vmatpush1.msra.mxu0 %v320
        %345 = vmatprep.subr.mxu0 0.0
        %346 = vmatpush1.msra.mxu0 %v321
        %347 = vmatprep.subr.mxu0 0.0
        %348 = vmatpush1.msra.mxu0 %v322
        %349 = vmatprep.subr.mxu0 0.0
        %350 = vmatpush1.msra.mxu0 %v323
        %351 = vmatprep.subr.mxu0 0.0
        %352 = vmatpush1.msra.mxu0 %v324
        %353 = vmatprep.subr.mxu0 0.0
        %354 = vmatpush1.msra.mxu0 %v325
        %355 = vmatprep.subr.mxu0 0.0
        %356 = vmatpush1.msra.mxu0 %v326
        %357 = vmatprep.subr.mxu0 0.0
        %358 = vmatpush1.msra.mxu0 %v327
        %359 = vmatprep.subr.mxu0 0.0
        %360 = vmatpush1.msra.mxu0 %v328
        %361 = vmatprep.subr.mxu0 0.0
        %362 = vmatpush1.msra.mxu0 0.0
        %363 = vmatprep.subr.mxu0 0.0
        %364 = vmatpush1.msra.mxu0 0.0
        %365 = vmatprep.subr.mxu0 0.0
        %366 = vmatpush1.msra.mxu0 0.0
        %367 = vmatprep.subr.mxu0 0.0
        %368 = vmatpush1.msra.mxu0 0.0
        %369 = vmatprep.subr.mxu0 0.0
        %370 = vmatpush1.msra.mxu0 0.0
        %371 = vmatprep.subr.mxu0 0.0
        %372 = vmatpush1.msra.mxu0 0.0
        %373 = vmatprep.subr.mxu0 0.0
        %374 = vmatpush1.msra.mxu0 0.0
        %375 = vmatprep.subr.mxu0 0.0
        %376 = vmatpush1.msra.mxu0 0.0
        %377 = vmatprep.subr.mxu0 0.0
        %378 = vmatpush1.msra.mxu0 0.0
        %379 = vmatprep.subr.mxu0 0.0
        %380 = vmatpush1.msra.mxu0 0.0
        %381 = vmatprep.subr.mxu0 0.0
        %382 = vmatpush1.msra.mxu0 0.0
        %383 = vmatprep.subr.mxu0 0.0
        %384 = vmatpush1.msra.mxu0 0.0
        %385 = vmatprep.subr.mxu0 0.0
        %386 = vmatpush1.msra.mxu0 0.0
        %387 = vmatprep.subr.mxu0 0.0
        %388 = vmatpush1.msra.mxu0 0.0
        %389 = vmatprep.subr.mxu0 0.0
        %390 = vmatpush1.msra.mxu0 0.0
        %391 = vmatprep.subr.mxu0 0.0
        %392 = vmatpush1.msra.mxu0 0.0
        %393 = vmatprep.mubr.f32.mxu0 0.0
        %394 = vmatmul.mubr.f32.gmra.mrb[0].mxu0 %v311
        %v395 = vpop.f32.mrb[0].mxu0
        %v396 = vadd.f32 0.0, %v395
        %v397 = vpop.f32.mrb[0].mxu0
        %398 = vmatprep.mubr.f32.mxu0 0.0
        %399 = vmatmul.mubr.f32.gmra.mrb[0].mxu0 %v312
        %v400 = vpop.f32.mrb[0].mxu0
        %v401 = vadd.f32 0.0, %v400
        %v402 = vpop.f32.mrb[0].mxu0
        %403 = vdwg.mxu0
        %v404 = vld [vmem:[#allocation2] sm:$0xff]
        %v405 = vld [vmem:[#allocation2 + $0x8] sm:$0xff]
        %v406 = vld [vmem:[%s268] sm:$0xff]
        %v407 = vld [vmem:[%s268 + $0x8] sm:$0xff]
        %vm408 = vcmask 130048
        %v410 = vsel %vm408, %v406, 0
        %v413 = vsel %vm408, %v407, 0
        %415 = vmatprep.subr.mxu0 0.0
        %416 = vmatpush1.msra.mxu0 %v396
        %417 = vmatprep.subr.mxu0 0.0
        %418 = vmatpush1.msra.mxu0 %v401
        %419 = vmatprep.subr.mxu0 0.0
        %420 = vmatpush1.msra.mxu0 0.0
        %421 = vmatprep.subr.mxu0 0.0
        %422 = vmatpush1.msra.mxu0 0.0
        %423 = vmatprep.subr.mxu0 0.0
        %424 = vmatpush1.msra.mxu0 0.0
        %425 = vmatprep.subr.mxu0 0.0
        %426 = vmatpush1.msra.mxu0 0.0
        %427 = vmatprep.subr.mxu0 0.0
        %428 = vmatpush1.msra.mxu0 0.0
        %429 = vmatprep.subr.mxu0 0.0
        %430 = vmatpush1.msra.mxu0 0.0
        %431 = vmatprep.subr.mxu0 0.0
        %432 = vmatpush1.msra.mxu0 0.0
        %433 = vmatprep.subr.mxu0 0.0
        %434 = vmatpush1.msra.mxu0 0.0
        %435 = vmatprep.subr.mxu0 0.0
        %436 = vmatpush1.msra.mxu0 0.0
        %437 = vmatprep.subr.mxu0 0.0
        %438 = vmatpush1.msra.mxu0 0.0
        %439 = vmatprep.subr.mxu0 0.0
        %440 = vmatpush1.msra.mxu0 0.0
        %441 = vmatprep.subr.mxu0 0.0
        %442 = vmatpush1.msra.mxu0 0.0
        %443 = vmatprep.subr.mxu0 0.0
        %444 = vmatpush1.msra.mxu0 0.0
        %445 = vmatprep.subr.mxu0 0.0
        %446 = vmatpush1.msra.mxu0 0.0
        %447 = vmatprep.subr.mxu0 0.0
        %448 = vmatpush1.msra.mxu0 0.0
        %449 = vmatprep.subr.mxu0 0.0
        %450 = vmatpush1.msra.mxu0 0.0
        %451 = vmatprep.subr.mxu0 0.0
        %452 = vmatpush1.msra.mxu0 0.0
        %453 = vmatprep.subr.mxu0 0.0
        %454 = vmatpush1.msra.mxu0 0.0
        %455 = vmatprep.subr.mxu0 0.0
        %456 = vmatpush1.msra.mxu0 0.0
        %457 = vmatprep.subr.mxu0 0.0
        %458 = vmatpush1.msra.mxu0 0.0
        %459 = vmatprep.subr.mxu0 0.0
        %460 = vmatpush1.msra.mxu0 0.0
        %461 = vmatprep.subr.mxu0 0.0
        %462 = vmatpush1.msra.mxu0 0.0
        %463 = vmatprep.subr.mxu0 0.0
        %464 = vmatpush1.msra.mxu0 0.0
        %465 = vmatprep.subr.mxu0 0.0
        %466 = vmatpush1.msra.mxu0 0.0
        %467 = vmatprep.subr.mxu0 0.0
        %468 = vmatpush1.msra.mxu0 0.0
        %469 = vmatprep.subr.mxu0 0.0
        %470 = vmatpush1.msra.mxu0 0.0
        %471 = vmatprep.subr.mxu0 0.0
        %472 = vmatpush1.msra.mxu0 0.0
        %473 = vmatprep.subr.mxu0 0.0
        %474 = vmatpush1.msra.mxu0 0.0
        %475 = vmatprep.subr.mxu0 0.0
        %476 = vmatpush1.msra.mxu0 0.0
        %477 = vmatprep.subr.mxu0 0.0
        %478 = vmatpush1.msra.mxu0 0.0
        %479 = vmatprep.mubr.f32.mxu0 0.0
        %480 = vmatmul.mubr.f32.gmra.mrb[0].mxu0 %v410
        %v481 = vpop.f32.mrb[0].mxu0
        %v482 = vadd.f32 0.0, %v481
        %v483 = vpop.f32.mrb[0].mxu0
        %484 = vmatprep.mubr.f32.mxu0 0.0
        %485 = vmatmul.mubr.f32.gmra.mrb[0].mxu0 %v413
        %v486 = vpop.f32.mrb[0].mxu0
        %v487 = vadd.f32 0.0, %v486
        %v488 = vpop.f32.mrb[0].mxu0
        %489 = vdwg.mxu0
        %v490 = vadd.f32 %v404, %v482
        %v491 = vadd.f32 %v405, %v487
        %492 = vst [vmem:[#allocation2] sm:$0xff] %v490
        %493 = vst [vmem:[#allocation2 + $0x8] sm:$0xff] %v491
        // Predicated region
        $region53: #{tpu_custom_call.1} parent=35 // pred_check
          %p494 = pneg %p305
        $region54: #{tpu_custom_call.1} parent=35 // pred_check_branch
          %496 = sbr.rel (%p494) target = $region56
        $region55: #{tpu_custom_call.1} parent=35 // pred_region
          %v497 = vld [vmem:[#allocation2] sm:$0xff]
          %v498 = vld [vmem:[#allocation2 + $0x8] sm:$0xff]
          %v499 = vld [vmem:[%s3] sm:$0x1]
          %v501 = vlaneseq
          %v502 = vshrl.u32 %v501, 7
          %v503 = vsub.s32 0, %v502
          %v504 = vrot.slane %v499, %v503
          %v506 = vadd.f32 %v497, %v504
          %v507 = vadd.f32 %v498, %v504
          %508 = vst [vmem:[%s301] sm:$0xff] %v506
          %509 = vst [vmem:[%s301 + $0x8] sm:$0xff] %v507
        $region56: #{tpu_custom_call.1} parent=35 // pred_fallthru
          _
        %s510 = sand.u32 %s153, 1
        %s511 = scalar_lea.sflag [#allocation5], %s510
        %s512 = sand.u32 %s153, 1
        %s513 = smul.addr %s512, 16
        %s514 = scalar_lea.vmem [#allocation9], %s513
        // Predicated region
        $region57: #{tpu_custom_call.1} parent=35 // pred_check
          %p515 = pneg %p163
        $region58: #{tpu_custom_call.1} parent=35 // pred_check_branch
          %517 = sbr.rel (%p515) target = $region60
        $region59: #{tpu_custom_call.1} parent=35 // pred_region
          %s518 = smul.u32 2, %s30
          %s520 = ssub.s32 256, 256
          %521 = vsyncadd %s511, %s520
          %s522 = smul.addr %s29, 2
          %s523 = sadd.s32 %s518, %s522
          %s524 = smul.addr %s523, 128
          %s525 = scalar_lea.hbm %s4, %s524
          %s526 = sshll.u32 %s514, 4
          %s527 = int_to_ptr.vmem [resolvable:$true] %s526
          %532 = dma.vmem_to_hbm [thread:$0]  %s527, 256, %s525, %s511, 128, 128, 8
        $region60: #{tpu_custom_call.1} parent=35 // pred_fallthru
          _
      $region36: #{tpu_custom_call.1} parent=5 // pred_fallthru
        _
      %p533 = scmp.le.s32.totalorder 2, %s19
      // Predicated region
      $region61: #{tpu_custom_call.1} parent=5 // pred_check
        %p534 = pneg %p533
      $region62: #{tpu_custom_call.1} parent=5 // pred_check_branch
        %536 = sbr.rel (%p534) target = $region64
      $region63: #{tpu_custom_call.1} parent=5 // pred_region
        %s537 = ssub.s32 %s19, 2
        // Predicated region
        $region65: #{tpu_custom_call.1} parent=63 // pred_check
          %p538 = pneg %p169
        $region66: #{tpu_custom_call.1} parent=63 // pred_check_branch
          %540 = sbr.rel (%p538) target = $region68
        $region67: #{tpu_custom_call.1} parent=63 // pred_region
          %s541 = sand.u32 %s154, 1
          %s542 = scalar_lea.sflag [#allocation5], %s541
          %s543 = sand.u32 %s154, 1
          %s544 = smul.addr %s543, 16
          %s545 = scalar_lea.vmem [#allocation9], %s544
          %546 = dma.done %s542, 256
        $region68: #{tpu_custom_call.1} parent=63 // pred_fallthru
          _
      $region64: #{tpu_custom_call.1} parent=5 // pred_fallthru
        _
    $region6: #{tpu_custom_call.1} parent=1 // loop_footer
      %s23 = sadd.s32 1, %s19
    $region7: #{tpu_custom_call.1} parent=1 // loop_footer_branch
      %18 = sbr.rel target = $region3
    $region8: #{tpu_custom_call.1} parent=1 // loop_exit
      _
    %547 = vsyncpa [#allocation4], 1
    %s548 = scalar_lea.sflag [#allocation4], 1
    %549 = vsyncpa %s548, 1
    %550 = vsyncpa [#allocation7], 1
    %s551 = scalar_lea.sflag [#allocation7], 1
    %552 = vsyncpa %s551, 1
    %553 = vsyncpa [#allocation5], 1
    %s554 = scalar_lea.sflag [#allocation5], 1
    %555 = vsyncpa %s554, 1

</llo_original>
